<compile_context>
chip_gen: v7x
topology: tpu7x:2x2x1
jax: 0.10.0
libtpu: 0.0.40
codegen_flags: <defaults>
</compile_context>

<pallas_src>
import functools

import jax
import jax.numpy as jnp
from jax.experimental import pallas as pl
from jax.experimental.pallas import tpu as pltpu


# ---------------------------------------------------------------------------
# Kernel
# ---------------------------------------------------------------------------
def _vae_kernel(
    x_ref, eps_ref,
    w_enc_ref, b_enc_ref,
    w_muvar_ref, b_muvar_ref,
    w_dec_ref, b_dec_ref,
    w_out_ref, b_out_ref,
    pred_ref, muvar_ref,
    *, lat_half,
):
    mm_dtype = w_enc_ref.dtype          # f32, or bf16 for MXU-operand mode
    x = x_ref[...].astype(mm_dtype)
    eps = eps_ref[...]                  # f32, zero-padded beyond latent_dim

    # ---- Encoder ----
    hidden = jnp.dot(x, w_enc_ref[...], preferred_element_type=jnp.float32)
    hidden = jnp.maximum(hidden + b_enc_ref[...], 0.0)  # ReLU (f32)

    # Fused mu|var projection: one MXU matmul, 2*lat_half (=128) lanes total.
    # Layout: lanes [0, lat_half) = mu (padded), [lat_half, 2*lat_half) = var.
    muvar = jnp.dot(hidden.astype(mm_dtype), w_muvar_ref[...],
                    preferred_element_type=jnp.float32)
    muvar = muvar + b_muvar_ref[...]

    # ---- Reparameterization: z = eps * exp(var/2) + mu ----
    # Align var with mu's lanes via an XLU roll by exactly half the width
    # (direction-invariant since shift == width/2).  The upper half of z holds
    # var + 0*exp(mu/2) = var, which is killed by the zero pad rows of w_dec.
    var_aligned = pltpu.roll(muvar, shift=lat_half, axis=1)
    z = eps * jnp.exp(var_aligned * 0.5) + muvar

    # ---- Decoder ----
    h2 = jnp.dot(z.astype(mm_dtype), w_dec_ref[...],
                 preferred_element_type=jnp.float32)
    h2 = jnp.maximum(h2 + b_dec_ref[...], 0.0)  # ReLU (f32)

    logits = jnp.dot(h2.astype(mm_dtype), w_out_ref[...],
                     preferred_element_type=jnp.float32)
    logits = logits + b_out_ref[...]
    # Exact sigmoid with a single EUP transcendental: sigmoid(x) = 0.5*tanh(x/2)+0.5
    pred = 0.5 * jnp.tanh(0.5 * logits) + 0.5

    pred_ref[...] = pred.astype(pred_ref.dtype)
    muvar_ref[...] = muvar.astype(muvar_ref.dtype)


# ---------------------------------------------------------------------------
# Helpers
# ---------------------------------------------------------------------------
def _round_up(n, m):
    return ((n + m - 1) // m) * m


def _cdiv(a, b):
    return -(-a // b)


def _pad2d(a, rows, cols):
    return jnp.pad(a, ((0, rows - a.shape[0]), (0, cols - a.shape[1])))


def _choose_batch_tile(B, max_tb=1024):
    """Batch tile: multiple of 8 (sublane), >=2 grid steps when B > 8 (so the
    'parallel' batch axis can shard across both v7x TensorCores), sized to
    minimize batch padding, capped at max_tb (VMEM footprint stays ~MiB)."""
    if B <= 8:
        return 8
    n_steps = max(2, _cdiv(B, max_tb))
    return _round_up(_cdiv(B, n_steps), 8)


# ---------------------------------------------------------------------------
# One-time parameter preparation (padding/concat hoisted out of the hot path)
# ---------------------------------------------------------------------------
def prepare_params(params, *, matmul_dtype=jnp.float32):
    """Pad weights to lane-dense shapes once.  Weights stored [in, out].

    matmul_dtype=jnp.bfloat16 enables full-rate MXU on v6e/v7x (f32 accumulation
    and f32 elementwise math are preserved); default f32 keeps exact numerics.
    Biases stay f32 (VPU adds).
    """
    airfoil_dim, hidden_dim = params["w_enc"].shape
    latent_dim = params["w_mu"].shape[1]
    A = _round_up(airfoil_dim, 128)
    H = _round_up(hidden_dim, 128)
    LH = _round_up(latent_dim, 64)   # half-width of the fused mu|var block (2*LH % 128 == 0)

    w_muvar = jnp.concatenate(
        [_pad2d(params["w_mu"], H, LH), _pad2d(params["w_var"], H, LH)], axis=1)
    b_muvar = jnp.concatenate(
        [_pad2d(params["b_mu"], 1, LH), _pad2d(params["b_var"], 1, LH)], axis=1)

    return dict(
        w_enc=_pad2d(params["w_enc"], A, H).astype(matmul_dtype),
        b_enc=_pad2d(params["b_enc"], 1, H),
        w_muvar=w_muvar.astype(matmul_dtype),
        b_muvar=b_muvar,
        w_dec=_pad2d(params["w_dec"], 2 * LH, H).astype(matmul_dtype),
        b_dec=_pad2d(params["b_dec"], 1, H),
        w_out=_pad2d(params["w_out"], H, A).astype(matmul_dtype),
        b_out=_pad2d(params["b_out"], 1, A),
    )


# ---------------------------------------------------------------------------
# Forward wrapper
# ---------------------------------------------------------------------------
@jax.jit
def vae_forward(x, eps, prep):
    """Full VAE forward in one Pallas kernel.

    x:    [B, airfoil_dim] float32
    eps:  [B, latent_dim]  float32 (standard-normal noise)
    prep: output of prepare_params(params).
    Returns (predicted [B, airfoil_dim], z_mu [B, latent], z_var [B, latent]).
    """
    B, airfoil_dim = x.shape
    latent_dim = eps.shape[1]
    A, H = prep["w_enc"].shape
    MUVAR = prep["w_muvar"].shape[1]
    LH = MUVAR // 2

    TB = _choose_batch_tile(B)
    Bp = _round_up(B, TB)
    grid = (Bp // TB,)

    # Only activations are padded per call (exact-zero padding => exact results).
    x_p = _pad2d(x, Bp, A)
    eps_p = _pad2d(eps, Bp, MUVAR)

    # Activations tiled along the batch; weights/biases use a constant block
    # index so they stay VMEM-resident across all grid steps (no re-DMA).
    in_specs = [
        pl.BlockSpec((TB, A), lambda i: (i, 0)),        # x
        pl.BlockSpec((TB, MUVAR), lambda i: (i, 0)),    # eps
        pl.BlockSpec((A, H), lambda i: (0, 0)),         # w_enc
        pl.BlockSpec((1, H), lambda i: (0, 0)),         # b_enc
        pl.BlockSpec((H, MUVAR), lambda i: (0, 0)),     # w_muvar
        pl.BlockSpec((1, MUVAR), lambda i: (0, 0)),     # b_muvar
        pl.BlockSpec((MUVAR, H), lambda i: (0, 0)),     # w_dec
        pl.BlockSpec((1, H), lambda i: (0, 0)),         # b_dec
        pl.BlockSpec((H, A), lambda i: (0, 0)),         # w_out
        pl.BlockSpec((1, A), lambda i: (0, 0)),         # b_out
    ]
    out_shapes = (
        jax.ShapeDtypeStruct((Bp, A), jnp.float32),      # predicted (padded)
        jax.ShapeDtypeStruct((Bp, MUVAR), jnp.float32),  # mu | var  (padded)
    )
    out_specs = (
        pl.BlockSpec((TB, A), lambda i: (i, 0)),
        pl.BlockSpec((TB, MUVAR), lambda i: (i, 0)),
    )

    # Advisory cost estimate for the padded, per-call work actually performed.
    flops = 2 * Bp * (A * H + H * MUVAR + MUVAR * H + H * A)
    transcendentals = Bp * (MUVAR + A)  # exp (reparam) + tanh (sigmoid)
    weight_bytes = sum(int(v.size) * v.dtype.itemsize for v in prep.values())
    io_bytes = 4 * Bp * (A + MUVAR) * 2  # x+eps in, pred+muvar out (f32)
    cost = pl.CostEstimate(flops=flops,
                           transcendentals=transcendentals,
                           bytes_accessed=weight_bytes + io_bytes)

    pred_p, muvar_p = pl.pallas_call(
        functools.partial(_vae_kernel, lat_half=LH),
        out_shape=out_shapes,
        grid=grid,
        in_specs=in_specs,
        out_specs=out_specs,
        compiler_params=pltpu.CompilerParams(
            dimension_semantics=("parallel",),  # batch axis -> both v7x TCs
        ),
        cost_estimate=cost,
    )(x_p, eps_p,
      prep["w_enc"], prep["b_enc"], prep["w_muvar"], prep["b_muvar"],
      prep["w_dec"], prep["b_dec"], prep["w_out"], prep["b_out"])

    # Slice off padding outside the kernel (cheap XLA slices).
    pred = pred_p[:B, :airfoil_dim]
    z_mu = muvar_p[:B, :latent_dim]
    z_var = muvar_p[:B, LH:LH + latent_dim]
    return pred, z_mu, z_var


# ---------------------------------------------------------------------------
# Params init + pure-JAX reference
# ---------------------------------------------------------------------------
def init_params(key, airfoil_dim, hidden_dim, latent_dim):
    """nn.Linear-style init (uniform +/- 1/sqrt(fan_in)); weights stored [in, out]."""
    def linear(key, fan_in, fan_out):
        kw, kb = jax.random.split(key)
        bound = 1.0 / jnp.sqrt(fan_in)
        w = jax.random.uniform(kw, (fan_in, fan_out), jnp.float32, -bound, bound)
        b = jax.random.uniform(kb, (1, fan_out), jnp.float32, -bound, bound)
        return w, b

    keys = jax.random.split(key, 5)
    w_enc, b_enc = linear(keys[0], airfoil_dim, hidden_dim)
    w_mu, b_mu = linear(keys[1], hidden_dim, latent_dim)
    w_var, b_var = linear(keys[2], hidden_dim, latent_dim)
    w_dec, b_dec = linear(keys[3], latent_dim, hidden_dim)
    w_out, b_out = linear(keys[4], hidden_dim, airfoil_dim)
    return dict(w_enc=w_enc, b_enc=b_enc, w_mu=w_mu, b_mu=b_mu,
                w_var=w_var, b_var=b_var, w_dec=w_dec, b_dec=b_dec,
                w_out=w_out, b_out=b_out)


def vae_forward_ref(x, eps, params):
    hidden = jax.nn.relu(x @ params["w_enc"] + params["b_enc"])
    z_mu = hidden @ params["w_mu"] + params["b_mu"]
    z_var = hidden @ params["w_var"] + params["b_var"]
    z = eps * jnp.exp(z_var / 2.0) + z_mu
    h2 = jax.nn.relu(z @ params["w_dec"] + params["b_dec"])
    pred = jax.nn.sigmoid(h2 @ params["w_out"] + params["b_out"])
    return pred, z_mu, z_var


# ---------------------------------------------------------------------------
# Demo / self-check
# ---------------------------------------------------------------------------
if __name__ == "__main__":
    airfoil_dim, hidden_dim, latent_dim = 32, 64, 16

    key = jax.random.PRNGKey(0)
    k_params, k_data = jax.random.split(key)
    params = init_params(k_params, airfoil_dim, hidden_dim, latent_dim)

    # Pad/concat weights ONCE, outside the per-call hot path.
    prep_f32 = prepare_params(params)                                   # exact path
    prep_bf16 = prepare_params(params, matmul_dtype=jnp.bfloat16)       # v6e/v7x MXU path

    # Two batch sizes: tiny (single grid step) and one exercising a 2-step grid
    # with minimal batch padding (300 -> 2 x 152).
    for batch in (8, 300):
        kx, keps, k_data = jax.random.split(k_data, 3)
        x = jax.random.normal(kx, (batch, airfoil_dim), jnp.float32)
        eps = jax.random.normal(keps, (batch, latent_dim), jnp.float32)

        pred, z_mu, z_var = vae_forward(x, eps, prep_f32)
        jax.block_until_ready((pred, z_mu, z_var))

        pred_r, mu_r, var_r = vae_forward_ref(x, eps, params)
        assert jnp.allclose(z_mu, mu_r, atol=1e-4), f"z_mu mismatch (B={batch})"
        assert jnp.allclose(z_var, var_r, atol=1e-4), f"z_var mismatch (B={batch})"
        assert jnp.allclose(pred, pred_r, atol=1e-3), f"predicted mismatch (B={batch})"

    # bf16-MXU-operand path (coarse sanity check only: bf16 operands, f32 accum).
    pred_b, mu_b, var_b = vae_forward(x, eps, prep_bf16)
    jax.block_until_ready((pred_b, mu_b, var_b))
    assert jnp.allclose(mu_b, mu_r, atol=1e-1), "bf16 z_mu mismatch"
    assert jnp.allclose(var_b, var_r, atol=1e-1), "bf16 z_var mismatch"
    assert jnp.allclose(pred_b, pred_r, atol=1e-1), "bf16 predicted mismatch"

    print("KERNEL_OK")
</pallas_src>

<mosaic_0001>
module attributes {stable_mosaic.version = 11 : i64} {
  func.func @_vae_kernel(%arg0: i32, %arg1: memref<8x128xf32, #tpu.memory_space<vmem>>, %arg2: memref<8x128xf32, #tpu.memory_space<vmem>>, %arg3: memref<128x128xf32, #tpu.memory_space<vmem>>, %arg4: memref<1x128xf32, #tpu.memory_space<vmem>>, %arg5: memref<128x128xf32, #tpu.memory_space<vmem>>, %arg6: memref<1x128xf32, #tpu.memory_space<vmem>>, %arg7: memref<128x128xf32, #tpu.memory_space<vmem>>, %arg8: memref<1x128xf32, #tpu.memory_space<vmem>>, %arg9: memref<128x128xf32, #tpu.memory_space<vmem>>, %arg10: memref<1x128xf32, #tpu.memory_space<vmem>>, %arg11: memref<8x128xf32, #tpu.memory_space<vmem>>, %arg12: memref<8x128xf32, #tpu.memory_space<vmem>>) attributes {dimension_semantics = [#tpu.dimension_semantics<parallel>], iteration_bounds = array<i64: 1>, scalar_prefetch = 0 : i64, scratch_operands = 0 : i64, tpu.core_type = #tpu.core_type<tc>, window_params = [{transform_indices = @transform_0, window_bounds = array<i64: 8, 128>}, {transform_indices = @transform_1, window_bounds = array<i64: 8, 128>}, {pipeline_mode = #tpu.pipeline_mode<synchronous>, transform_indices = @transform_2, window_bounds = array<i64: 128, 128>}, {pipeline_mode = #tpu.pipeline_mode<synchronous>, transform_indices = @transform_3, window_bounds = array<i64: 1, 128>}, {pipeline_mode = #tpu.pipeline_mode<synchronous>, transform_indices = @transform_4, window_bounds = array<i64: 128, 128>}, {pipeline_mode = #tpu.pipeline_mode<synchronous>, transform_indices = @transform_5, window_bounds = array<i64: 1, 128>}, {pipeline_mode = #tpu.pipeline_mode<synchronous>, transform_indices = @transform_6, window_bounds = array<i64: 128, 128>}, {pipeline_mode = #tpu.pipeline_mode<synchronous>, transform_indices = @transform_7, window_bounds = array<i64: 1, 128>}, {pipeline_mode = #tpu.pipeline_mode<synchronous>, transform_indices = @transform_8, window_bounds = array<i64: 128, 128>}, {pipeline_mode = #tpu.pipeline_mode<synchronous>, transform_indices = @transform_9, window_bounds = array<i64: 1, 128>}, {transform_indices = @transform_10, window_bounds = array<i64: 8, 128>}, {transform_indices = @transform_11, window_bounds = array<i64: 8, 128>}]} {
    %c0 = arith.constant 0 : index
    %c0_0 = arith.constant 0 : index
    %0 = vector.load %arg1[%c0, %c0_0] : memref<8x128xf32, #tpu.memory_space<vmem>>, vector<8x128xf32>
    %c0_1 = arith.constant 0 : index
    %c0_2 = arith.constant 0 : index
    %1 = vector.load %arg2[%c0_1, %c0_2] : memref<8x128xf32, #tpu.memory_space<vmem>>, vector<8x128xf32>
    %c0_3 = arith.constant 0 : index
    %c0_4 = arith.constant 0 : index
    %2 = vector.load %arg3[%c0_3, %c0_4] : memref<128x128xf32, #tpu.memory_space<vmem>>, vector<128x128xf32>
    %cst = arith.constant dense<0.000000e+00> : vector<8x128xf32>
    %3 = tpu.matmul %0, %2, %cst {dimension_numbers = #tpu.dot_dimension_numbers<[1], [0], [0], [1], [0, 0, 1, 1], [], []>} : vector<8x128xf32>, vector<128x128xf32>, vector<8x128xf32> -> vector<8x128xf32>
    %c0_5 = arith.constant 0 : index
    %c0_6 = arith.constant 0 : index
    %4 = vector.load %arg4[%c0_5, %c0_6] : memref<1x128xf32, #tpu.memory_space<vmem>>, vector<1x128xf32>
    %5 = vector.broadcast %4 : vector<1x128xf32> to vector<8x128xf32>
    %6 = arith.addf %3, %5 : vector<8x128xf32>
    %cst_7 = arith.constant 0.000000e+00 : f32
    %7 = vector.broadcast %cst_7 : f32 to vector<8x128xf32>
    %8 = arith.maximumf %6, %7 : vector<8x128xf32>
    %c0_8 = arith.constant 0 : index
    %c0_9 = arith.constant 0 : index
    %9 = vector.load %arg5[%c0_8, %c0_9] : memref<128x128xf32, #tpu.memory_space<vmem>>, vector<128x128xf32>
    %cst_10 = arith.constant dense<0.000000e+00> : vector<8x128xf32>
    %10 = tpu.matmul %8, %9, %cst_10 {dimension_numbers = #tpu.dot_dimension_numbers<[1], [0], [0], [1], [0, 0, 1, 1], [], []>} : vector<8x128xf32>, vector<128x128xf32>, vector<8x128xf32> -> vector<8x128xf32>
    %c0_11 = arith.constant 0 : index
    %c0_12 = arith.constant 0 : index
    %11 = vector.load %arg6[%c0_11, %c0_12] : memref<1x128xf32, #tpu.memory_space<vmem>>, vector<1x128xf32>
    %12 = vector.broadcast %11 : vector<1x128xf32> to vector<8x128xf32>
    %13 = arith.addf %10, %12 : vector<8x128xf32>
    %c64_i32 = arith.constant 64 : i32
    %14 = tpu.dynamic_rotate %13 by %c64_i32 dim 1 : vector<8x128xf32>, i32 -> vector<8x128xf32>
    %cst_13 = arith.constant 5.000000e-01 : f32
    %15 = vector.broadcast %cst_13 : f32 to vector<8x128xf32>
    %16 = arith.mulf %14, %15 : vector<8x128xf32>
    %17 = math.exp %16 : vector<8x128xf32>
    %18 = arith.mulf %1, %17 : vector<8x128xf32>
    %19 = arith.addf %18, %13 : vector<8x128xf32>
    %c0_14 = arith.constant 0 : index
    %c0_15 = arith.constant 0 : index
    %20 = vector.load %arg7[%c0_14, %c0_15] : memref<128x128xf32, #tpu.memory_space<vmem>>, vector<128x128xf32>
    %cst_16 = arith.constant dense<0.000000e+00> : vector<8x128xf32>
    %21 = tpu.matmul %19, %20, %cst_16 {dimension_numbers = #tpu.dot_dimension_numbers<[1], [0], [0], [1], [0, 0, 1, 1], [], []>} : vector<8x128xf32>, vector<128x128xf32>, vector<8x128xf32> -> vector<8x128xf32>
    %c0_17 = arith.constant 0 : index
    %c0_18 = arith.constant 0 : index
    %22 = vector.load %arg8[%c0_17, %c0_18] : memref<1x128xf32, #tpu.memory_space<vmem>>, vector<1x128xf32>
    %23 = vector.broadcast %22 : vector<1x128xf32> to vector<8x128xf32>
    %24 = arith.addf %21, %23 : vector<8x128xf32>
    %cst_19 = arith.constant 0.000000e+00 : f32
    %25 = vector.broadcast %cst_19 : f32 to vector<8x128xf32>
    %26 = arith.maximumf %24, %25 : vector<8x128xf32>
    %c0_20 = arith.constant 0 : index
    %c0_21 = arith.constant 0 : index
    %27 = vector.load %arg9[%c0_20, %c0_21] : memref<128x128xf32, #tpu.memory_space<vmem>>, vector<128x128xf32>
    %cst_22 = arith.constant dense<0.000000e+00> : vector<8x128xf32>
    %28 = tpu.matmul %26, %27, %cst_22 {dimension_numbers = #tpu.dot_dimension_numbers<[1], [0], [0], [1], [0, 0, 1, 1], [], []>} : vector<8x128xf32>, vector<128x128xf32>, vector<8x128xf32> -> vector<8x128xf32>
    %c0_23 = arith.constant 0 : index
    %c0_24 = arith.constant 0 : index
    %29 = vector.load %arg10[%c0_23, %c0_24] : memref<1x128xf32, #tpu.memory_space<vmem>>, vector<1x128xf32>
    %30 = vector.broadcast %29 : vector<1x128xf32> to vector<8x128xf32>
    %31 = arith.addf %28, %30 : vector<8x128xf32>
    %cst_25 = arith.constant 5.000000e-01 : f32
    %32 = vector.broadcast %cst_25 : f32 to vector<8x128xf32>
    %33 = arith.mulf %32, %31 : vector<8x128xf32>
    %34 = math.tanh %33 : vector<8x128xf32>
    %cst_26 = arith.constant 5.000000e-01 : f32
    %35 = vector.broadcast %cst_26 : f32 to vector<8x128xf32>
    %36 = arith.mulf %35, %34 : vector<8x128xf32>
    %cst_27 = arith.constant 5.000000e-01 : f32
    %37 = vector.broadcast %cst_27 : f32 to vector<8x128xf32>
    %38 = arith.addf %36, %37 : vector<8x128xf32>
    %c0_28 = arith.constant 0 : index
    %c0_29 = arith.constant 0 : index
    %39 = vector.load %arg11[%c0_28, %c0_29] : memref<8x128xf32, #tpu.memory_space<vmem>>, vector<8x128xf32>
    tpu.vector_store %arg11[%c0_28, %c0_29], %38 {strides = array<i32>} : memref<8x128xf32, #tpu.memory_space<vmem>>, vector<8x128xf32>,
    %c0_30 = arith.constant 0 : index
    %c0_31 = arith.constant 0 : index
    %40 = vector.load %arg12[%c0_30, %c0_31] : memref<8x128xf32, #tpu.memory_space<vmem>>, vector<8x128xf32>
    tpu.vector_store %arg12[%c0_30, %c0_31], %13 {strides = array<i32>} : memref<8x128xf32, #tpu.memory_space<vmem>>, vector<8x128xf32>,
    return
  }
  func.func @transform_0(%arg0: i32) -> (i32, i32) {
    %c0_i32 = arith.constant 0 : i32
    %c0_i32_0 = arith.constant 0 : i32
    return %arg0, %c0_i32 : i32, i32
  }
  func.func @transform_1(%arg0: i32) -> (i32, i32) {
    %c0_i32 = arith.constant 0 : i32
    %c0_i32_0 = arith.constant 0 : i32
    return %arg0, %c0_i32 : i32, i32
  }
  func.func @transform_2(%arg0: i32) -> (i32, i32) {
    %c0_i32 = arith.constant 0 : i32
    %c0_i32_0 = arith.constant 0 : i32
    %c0_i32_1 = arith.constant 0 : i32
    return %c0_i32, %c0_i32_0 : i32, i32
  }
  func.func @transform_3(%arg0: i32) -> (i32, i32) {
    %c0_i32 = arith.constant 0 : i32
    %c0_i32_0 = arith.constant 0 : i32
    %c0_i32_1 = arith.constant 0 : i32
    return %c0_i32, %c0_i32_0 : i32, i32
  }
  func.func @transform_4(%arg0: i32) -> (i32, i32) {
    %c0_i32 = arith.constant 0 : i32
    %c0_i32_0 = arith.constant 0 : i32
    %c0_i32_1 = arith.constant 0 : i32
    return %c0_i32, %c0_i32_0 : i32, i32
  }
  func.func @transform_5(%arg0: i32) -> (i32, i32) {
    %c0_i32 = arith.constant 0 : i32
    %c0_i32_0 = arith.constant 0 : i32
    %c0_i32_1 = arith.constant 0 : i32
    return %c0_i32, %c0_i32_0 : i32, i32
  }
  func.func @transform_6(%arg0: i32) -> (i32, i32) {
    %c0_i32 = arith.constant 0 : i32
    %c0_i32_0 = arith.constant 0 : i32
    %c0_i32_1 = arith.constant 0 : i32
    return %c0_i32, %c0_i32_0 : i32, i32
  }
  func.func @transform_7(%arg0: i32) -> (i32, i32) {
    %c0_i32 = arith.constant 0 : i32
    %c0_i32_0 = arith.constant 0 : i32
    %c0_i32_1 = arith.constant 0 : i32
    return %c0_i32, %c0_i32_0 : i32, i32
  }
  func.func @transform_8(%arg0: i32) -> (i32, i32) {
    %c0_i32 = arith.constant 0 : i32
    %c0_i32_0 = arith.constant 0 : i32
    %c0_i32_1 = arith.constant 0 : i32
    return %c0_i32, %c0_i32_0 : i32, i32
  }
  func.func @transform_9(%arg0: i32) -> (i32, i32) {
    %c0_i32 = arith.constant 0 : i32
    %c0_i32_0 = arith.constant 0 : i32
    %c0_i32_1 = arith.constant 0 : i32
    return %c0_i32, %c0_i32_0 : i32, i32
  }
  func.func @transform_10(%arg0: i32) -> (i32, i32) {
    %c0_i32 = arith.constant 0 : i32
    %c0_i32_0 = arith.constant 0 : i32
    return %arg0, %c0_i32 : i32, i32
  }
  func.func @transform_11(%arg0: i32) -> (i32, i32) {
    %c0_i32 = arith.constant 0 : i32
    %c0_i32_0 = arith.constant 0 : i32
    return %arg0, %c0_i32 : i32, i32
  }
}

</mosaic_0001>

<llo_original>
// kernel: vae_forward.1
$region0: #{vae_forward.1}
  #allocation0 [shape = 'u32[]', space=smem, size = 0x4, offset = 0x4, fixed_abs, tag = 'smem constant byte address 0x4 - core index']
  #allocation1 [shape = 'u32[144,128]{1,0:T(1,128)}', space=vmem, size = 0x12000, scoped, tag = 'internal scratch']
  %s0 = inlined_call_operand.vmem [shape: f32[8,128], index: 0, kind: input, shape index: {}]
  %s1 = inlined_call_operand.vmem [shape: f32[8,128], index: 1, kind: input, shape index: {}]
  %s2 = inlined_call_operand.hbm [shape: f32[128,128], index: 2, kind: input, shape index: {}]
  %s3 = inlined_call_operand.vmem [shape: f32[1,128], index: 3, kind: input, shape index: {}]
  %s4 = inlined_call_operand.hbm [shape: f32[128,128], index: 4, kind: input, shape index: {}]
  %s5 = inlined_call_operand.vmem [shape: f32[1,128], index: 5, kind: input, shape index: {}]
  %s6 = inlined_call_operand.hbm [shape: f32[128,128], index: 6, kind: input, shape index: {}]
  %s7 = inlined_call_operand.vmem [shape: f32[1,128], index: 7, kind: input, shape index: {}]
  %s8 = inlined_call_operand.hbm [shape: f32[128,128], index: 8, kind: input, shape index: {}]
  %s9 = inlined_call_operand.vmem [shape: f32[1,128], index: 9, kind: input, shape index: {}]
  %s10 = inlined_call_operand.hbm [shape: f32[8,128], index: 10, kind: output, shape index: {0}]
  %s11 = inlined_call_operand.vmem [shape: f32[8,128], index: 11, kind: output, shape index: {1}]
  %12 = xla_tuple %s10, %s11
  %s13 = sld [smem:[#allocation0]]
  $region74: #{vae_forward.1} parent=0
    _
  %s15 = ssub.s32 1, %s13
  %s16 = scalar_select 0, %s15, %s13
  $region1: #{vae_forward.1} parent=0
    #allocation2 [shape = 'u8[65536]{0}', space=vmem, size = 0x10000, scoped, tag = 'input window, operand 2, single buffered']
    #allocation3 [shape = 's32[1]{0}', space=sflag, size = 0x4, scoped, tag = 'scoped memory for vae_forward.1']
    #allocation4 [shape = 's32[1]{0}', space=sflag, size = 0x4, scoped, tag = 'scoped memory for vae_forward.1']
    #allocation5 [shape = 'u8[65536]{0}', space=vmem, size = 0x10000, scoped, tag = 'input window, operand 4, single buffered']
    #allocation6 [shape = 's32[1]{0}', space=sflag, size = 0x4, scoped, tag = 'scoped memory for vae_forward.1']
    #allocation7 [shape = 'u8[65536]{0}', space=vmem, size = 0x10000, scoped, tag = 'input window, operand 6, single buffered']
    #allocation8 [shape = 'u8[65536]{0}', space=vmem, size = 0x10000, scoped, tag = 'input window, operand 8, single buffered']
    #allocation9 [shape = 's32[1]{0}', space=sflag, size = 0x4, scoped, tag = 'scoped memory for vae_forward.1']
    #allocation10 [shape = 'u8[4096]{0}', space=vmem, size = 0x1000, scoped, tag = 'output window, operand 0, single buffered']
    %17 = vsyncpa [#allocation3], 0
    %18 = vsyncpa [#allocation6], 0
    %19 = vsyncpa [#allocation9], 0
    %20 = vsyncpa [#allocation4], 0
    // Predicated region
    $region2: #{vae_forward.1} parent=1 // pred_check
      _
    $region3: #{vae_forward.1} parent=1 // pred_check_branch
      %22 = sbr.rel (0) target = $region5
    $region4: #{vae_forward.1} parent=1 // pred_region
      _
    $region5: #{vae_forward.1} parent=1 // pred_fallthru
      _
    // Predicated region
    $region6: #{vae_forward.1} parent=1 // pred_check
      _
    $region7: #{vae_forward.1} parent=1 // pred_check_branch
      %24 = sbr.rel (0) target = $region9
    $region8: #{vae_forward.1} parent=1 // pred_region
      _
    $region9: #{vae_forward.1} parent=1 // pred_fallthru
      _
    // Predicated region
    $region10: #{vae_forward.1} parent=1 // pred_check
      _
    $region11: #{vae_forward.1} parent=1 // pred_check_branch
      %26 = sbr.rel (0) target = $region13
    $region12: #{vae_forward.1} parent=1 // pred_region
      %s28 = ssub.s32 2048, 2048
      %29 = vsyncadd [#allocation3], %s28
      %s30 = sshll.u32 [#allocation2], 4
      %s31 = int_to_ptr.vmem [resolvable:$true] %s30
      %36 = dma.hbm_to_vmem [thread:$0]  %s2, 2048, %s31, [#allocation3], 128, 128, 8
    $region13: #{vae_forward.1} parent=1 // pred_fallthru
      _
    // Predicated region
    $region14: #{vae_forward.1} parent=1 // pred_check
      _
    $region15: #{vae_forward.1} parent=1 // pred_check_branch
      %38 = sbr.rel (0) target = $region17
    $region16: #{vae_forward.1} parent=1 // pred_region
      _
    $region17: #{vae_forward.1} parent=1 // pred_fallthru
      _
    // Predicated region
    $region18: #{vae_forward.1} parent=1 // pred_check
      _
    $region19: #{vae_forward.1} parent=1 // pred_check_branch
      %40 = sbr.rel (0) target = $region21
    $region20: #{vae_forward.1} parent=1 // pred_region
      %s42 = ssub.s32 2048, 2048
      %43 = vsyncadd [#allocation6], %s42
      %s44 = sshll.u32 [#allocation5], 4
      %s45 = int_to_ptr.vmem [resolvable:$true] %s44
      %50 = dma.hbm_to_vmem [thread:$0]  %s4, 2048, %s45, [#allocation6], 128, 128, 8
    $region21: #{vae_forward.1} parent=1 // pred_fallthru
      _
    // Predicated region
    $region22: #{vae_forward.1} parent=1 // pred_check
      _
    $region23: #{vae_forward.1} parent=1 // pred_check_branch
      %52 = sbr.rel (0) target = $region25
    $region24: #{vae_forward.1} parent=1 // pred_region
      _
    $region25: #{vae_forward.1} parent=1 // pred_fallthru
      _
    // Predicated region
    $region26: #{vae_forward.1} parent=1 // pred_check
      _
    $region27: #{vae_forward.1} parent=1 // pred_check_branch
      %54 = sbr.rel (0) target = $region29
    $region28: #{vae_forward.1} parent=1 // pred_region
      %s56 = ssub.s32 2048, 2048
      %57 = vsyncadd [#allocation6], %s56
      %s58 = sshll.u32 [#allocation7], 4
      %s59 = int_to_ptr.vmem [resolvable:$true] %s58
      %64 = dma.hbm_to_vmem [thread:$0]  %s6, 2048, %s59, [#allocation6], 128, 128, 8
    $region29: #{vae_forward.1} parent=1 // pred_fallthru
      _
    // Predicated region
    $region30: #{vae_forward.1} parent=1 // pred_check
      _
    $region31: #{vae_forward.1} parent=1 // pred_check_branch
      %66 = sbr.rel (0) target = $region33
    $region32: #{vae_forward.1} parent=1 // pred_region
      _
    $region33: #{vae_forward.1} parent=1 // pred_fallthru
      _
    // Predicated region
    $region34: #{vae_forward.1} parent=1 // pred_check
      _
    $region35: #{vae_forward.1} parent=1 // pred_check_branch
      %68 = sbr.rel (0) target = $region37
    $region36: #{vae_forward.1} parent=1 // pred_region
      %s70 = ssub.s32 2048, 2048
      %71 = vsyncadd [#allocation9], %s70
      %s72 = sshll.u32 [#allocation8], 4
      %s73 = int_to_ptr.vmem [resolvable:$true] %s72
      %78 = dma.hbm_to_vmem [thread:$0]  %s8, 2048, %s73, [#allocation9], 128, 128, 8
    $region37: #{vae_forward.1} parent=1 // pred_fallthru
      _
    // Predicated region
    $region38: #{vae_forward.1} parent=1 // pred_check
      _
    $region39: #{vae_forward.1} parent=1 // pred_check_branch
      %80 = sbr.rel (0) target = $region41
    $region40: #{vae_forward.1} parent=1 // pred_region
      _
    $region41: #{vae_forward.1} parent=1 // pred_fallthru
      _
    // Predicated region
    $region42: #{vae_forward.1} parent=1 // pred_check
      _
    $region43: #{vae_forward.1} parent=1 // pred_check_branch
      %82 = sbr.rel (0) target = $region45
    $region44: #{vae_forward.1} parent=1 // pred_region
      %83 = dma.done [#allocation3], 2048
    $region45: #{vae_forward.1} parent=1 // pred_fallthru
      _
    // Predicated region
    $region46: #{vae_forward.1} parent=1 // pred_check
      _
    $region47: #{vae_forward.1} parent=1 // pred_check_branch
      %85 = sbr.rel (0) target = $region49
    $region48: #{vae_forward.1} parent=1 // pred_region
      %86 = dma.done [#allocation6], 2048
    $region49: #{vae_forward.1} parent=1 // pred_fallthru
      _
    // Predicated region
    $region50: #{vae_forward.1} parent=1 // pred_check
      _
    $region51: #{vae_forward.1} parent=1 // pred_check_branch
      %88 = sbr.rel (0) target = $region53
    $region52: #{vae_forward.1} parent=1 // pred_region
      %89 = dma.done [#allocation6], 2048
    $region53: #{vae_forward.1} parent=1 // pred_fallthru
      _
    // Predicated region
    $region54: #{vae_forward.1} parent=1 // pred_check
      _
    $region55: #{vae_forward.1} parent=1 // pred_check_branch
      %91 = sbr.rel (0) target = $region57
    $region56: #{vae_forward.1} parent=1 // pred_region
      %92 = dma.done [#allocation9], 2048
    $region57: #{vae_forward.1} parent=1 // pred_fallthru
      _
    %v93 = vld [vmem:[%s0] sm:$0xff]
    %v94 = vld [vmem:[%s1] sm:$0xff]
    %v95 = vld [vmem:[#allocation2] sm:$0xff]
    %v96 = vld [vmem:[#allocation2 + $0x8] sm:$0xff]
    %v97 = vld [vmem:[#allocation2 + $0x10] sm:$0xff]
    %v98 = vld [vmem:[#allocation2 + $0x18] sm:$0xff]
    %v99 = vld [vmem:[#allocation2 + $0x20] sm:$0xff]
    %v100 = vld [vmem:[#allocation2 + $0x28] sm:$0xff]
    %v101 = vld [vmem:[#allocation2 + $0x30] sm:$0xff]
    %v102 = vld [vmem:[#allocation2 + $0x38] sm:$0xff]
    %v103 = vld [vmem:[#allocation2 + $0x40] sm:$0xff]
    %v104 = vld [vmem:[#allocation2 + $0x48] sm:$0xff]
    %v105 = vld [vmem:[#allocation2 + $0x50] sm:$0xff]
    %v106 = vld [vmem:[#allocation2 + $0x58] sm:$0xff]
    %v107 = vld [vmem:[#allocation2 + $0x60] sm:$0xff]
    %v108 = vld [vmem:[#allocation2 + $0x68] sm:$0xff]
    %v109 = vld [vmem:[#allocation2 + $0x70] sm:$0xff]
    %v110 = vld [vmem:[#allocation2 + $0x78] sm:$0xff]
    %v111 = vld [vmem:[%s3] sm:$0x1]
    %v113 = vlaneseq
    %v114 = vshrl.u32 %v113, 7
    %v115 = vsub.s32 0, %v114
    %v116 = vrot.slane %v111, %v115
    %118 = vmatprep.subr.mxu0 0.0
    %119 = vmatpush1.msra.mxu0 %v95
    %120 = vmatprep.subr.mxu0 0.0
    %121 = vmatpush1.msra.mxu0 %v96
    %122 = vmatprep.subr.mxu0 0.0
    %123 = vmatpush1.msra.mxu0 %v97
    %124 = vmatprep.subr.mxu0 0.0
    %125 = vmatpush1.msra.mxu0 %v98
    %126 = vmatprep.subr.mxu0 0.0
    %127 = vmatpush1.msra.mxu0 %v99
    %128 = vmatprep.subr.mxu0 0.0
    %129 = vmatpush1.msra.mxu0 %v100
    %130 = vmatprep.subr.mxu0 0.0
    %131 = vmatpush1.msra.mxu0 %v101
    %132 = vmatprep.subr.mxu0 0.0
    %133 = vmatpush1.msra.mxu0 %v102
    %134 = vmatprep.subr.mxu0 0.0
    %135 = vmatpush1.msra.mxu0 %v103
    %136 = vmatprep.subr.mxu0 0.0
    %137 = vmatpush1.msra.mxu0 %v104
    %138 = vmatprep.subr.mxu0 0.0
    %139 = vmatpush1.msra.mxu0 %v105
    %140 = vmatprep.subr.mxu0 0.0
    %141 = vmatpush1.msra.mxu0 %v106
    %142 = vmatprep.subr.mxu0 0.0
    %143 = vmatpush1.msra.mxu0 %v107
    %144 = vmatprep.subr.mxu0 0.0
    %145 = vmatpush1.msra.mxu0 %v108
    %146 = vmatprep.subr.mxu0 0.0
    %147 = vmatpush1.msra.mxu0 %v109
    %148 = vmatprep.subr.mxu0 0.0
    %149 = vmatpush1.msra.mxu0 %v110
    %150 = vmatprep.subr.mxu0 0.0
    %151 = vmatpush1.msra.mxu0 0.0
    %152 = vmatprep.subr.mxu0 0.0
    %153 = vmatpush1.msra.mxu0 0.0
    %154 = vmatprep.subr.mxu0 0.0
    %155 = vmatpush1.msra.mxu0 0.0
    %156 = vmatprep.subr.mxu0 0.0
    %157 = vmatpush1.msra.mxu0 0.0
    %158 = vmatprep.subr.mxu0 0.0
    %159 = vmatpush1.msra.mxu0 0.0
    %160 = vmatprep.subr.mxu0 0.0
    %161 = vmatpush1.msra.mxu0 0.0
    %162 = vmatprep.subr.mxu0 0.0
    %163 = vmatpush1.msra.mxu0 0.0
    %164 = vmatprep.subr.mxu0 0.0
    %165 = vmatpush1.msra.mxu0 0.0
    %166 = vmatprep.subr.mxu0 0.0
    %167 = vmatpush1.msra.mxu0 0.0
    %168 = vmatprep.subr.mxu0 0.0
    %169 = vmatpush1.msra.mxu0 0.0
    %170 = vmatprep.subr.mxu0 0.0
    %171 = vmatpush1.msra.mxu0 0.0
    %172 = vmatprep.subr.mxu0 0.0
    %173 = vmatpush1.msra.mxu0 0.0
    %174 = vmatprep.subr.mxu0 0.0
    %175 = vmatpush1.msra.mxu0 0.0
    %176 = vmatprep.subr.mxu0 0.0
    %177 = vmatpush1.msra.mxu0 0.0
    %178 = vmatprep.subr.mxu0 0.0
    %179 = vmatpush1.msra.mxu0 0.0
    %180 = vmatprep.subr.mxu0 0.0
    %181 = vmatpush1.msra.mxu0 0.0
    %182 = vmatprep.mubr.f32.mxu0 0.0
    %183 = vmatmul.mubr.f32.gmra.mrb[0].mxu0 %v93
    %v184 = vpop.f32.mrb[0].mxu0
    %v185 = vadd.f32 %v116, %v184
    %v186 = vpop.f32.mrb[0].mxu0
    %187 = vdwg.mxu0
    %v188 = vmax.f32 %v185, 0.0
    %v189 = vld [vmem:[#allocation5] sm:$0xff]
    %v190 = vld [vmem:[#allocation5 + $0x8] sm:$0xff]
    %v191 = vld [vmem:[#allocation5 + $0x10] sm:$0xff]
    %v192 = vld [vmem:[#allocation5 + $0x18] sm:$0xff]
    %v193 = vld [vmem:[#allocation5 + $0x20] sm:$0xff]
    %v194 = vld [vmem:[#allocation5 + $0x28] sm:$0xff]
    %v195 = vld [vmem:[#allocation5 + $0x30] sm:$0xff]
    %v196 = vld [vmem:[#allocation5 + $0x38] sm:$0xff]
    %v197 = vld [vmem:[#allocation5 + $0x40] sm:$0xff]
    %v198 = vld [vmem:[#allocation5 + $0x48] sm:$0xff]
    %v199 = vld [vmem:[#allocation5 + $0x50] sm:$0xff]
    %v200 = vld [vmem:[#allocation5 + $0x58] sm:$0xff]
    %v201 = vld [vmem:[#allocation5 + $0x60] sm:$0xff]
    %v202 = vld [vmem:[#allocation5 + $0x68] sm:$0xff]
    %v203 = vld [vmem:[#allocation5 + $0x70] sm:$0xff]
    %v204 = vld [vmem:[#allocation5 + $0x78] sm:$0xff]
    %v205 = vld [vmem:[%s5] sm:$0x1]
    %v207 = vlaneseq
    %v208 = vshrl.u32 %v207, 7
    %v209 = vsub.s32 0, %v208
    %v210 = vrot.slane %v205, %v209
    %212 = vmatprep.subr.mxu0 0.0
    %213 = vmatpush1.msra.mxu0 %v189
    %214 = vmatprep.subr.mxu0 0.0
    %215 = vmatpush1.msra.mxu0 %v190
    %216 = vmatprep.subr.mxu0 0.0
    %217 = vmatpush1.msra.mxu0 %v191
    %218 = vmatprep.subr.mxu0 0.0
    %219 = vmatpush1.msra.mxu0 %v192
    %220 = vmatprep.subr.mxu0 0.0
    %221 = vmatpush1.msra.mxu0 %v193
    %222 = vmatprep.subr.mxu0 0.0
    %223 = vmatpush1.msra.mxu0 %v194
    %224 = vmatprep.subr.mxu0 0.0
    %225 = vmatpush1.msra.mxu0 %v195
    %226 = vmatprep.subr.mxu0 0.0
    %227 = vmatpush1.msra.mxu0 %v196
    %228 = vmatprep.subr.mxu0 0.0
    %229 = vmatpush1.msra.mxu0 %v197
    %230 = vmatprep.subr.mxu0 0.0
    %231 = vmatpush1.msra.mxu0 %v198
    %232 = vmatprep.subr.mxu0 0.0
    %233 = vmatpush1.msra.mxu0 %v199
    %234 = vmatprep.subr.mxu0 0.0
    %235 = vmatpush1.msra.mxu0 %v200
    %236 = vmatprep.subr.mxu0 0.0
    %237 = vmatpush1.msra.mxu0 %v201
    %238 = vmatprep.subr.mxu0 0.0
    %239 = vmatpush1.msra.mxu0 %v202
    %240 = vmatprep.subr.mxu0 0.0
    %241 = vmatpush1.msra.mxu0 %v203
    %242 = vmatprep.subr.mxu0 0.0
    %243 = vmatpush1.msra.mxu0 %v204
    %244 = vmatprep.subr.mxu0 0.0
    %245 = vmatpush1.msra.mxu0 0.0
    %246 = vmatprep.subr.mxu0 0.0
    %247 = vmatpush1.msra.mxu0 0.0
    %248 = vmatprep.subr.mxu0 0.0
    %249 = vmatpush1.msra.mxu0 0.0
    %250 = vmatprep.subr.mxu0 0.0
    %251 = vmatpush1.msra.mxu0 0.0
    %252 = vmatprep.subr.mxu0 0.0
    %253 = vmatpush1.msra.mxu0 0.0
    %254 = vmatprep.subr.mxu0 0.0
    %255 = vmatpush1.msra.mxu0 0.0
    %256 = vmatprep.subr.mxu0 0.0
    %257 = vmatpush1.msra.mxu0 0.0
    %258 = vmatprep.subr.mxu0 0.0
    %259 = vmatpush1.msra.mxu0 0.0
    %260 = vmatprep.subr.mxu0 0.0
    %261 = vmatpush1.msra.mxu0 0.0
    %262 = vmatprep.subr.mxu0 0.0
    %263 = vmatpush1.msra.mxu0 0.0
    %264 = vmatprep.subr.mxu0 0.0
    %265 = vmatpush1.msra.mxu0 0.0
    %266 = vmatprep.subr.mxu0 0.0
    %267 = vmatpush1.msra.mxu0 0.0
    %268 = vmatprep.subr.mxu0 0.0
    %269 = vmatpush1.msra.mxu0 0.0
    %270 = vmatprep.subr.mxu0 0.0
    %271 = vmatpush1.msra.mxu0 0.0
    %272 = vmatprep.subr.mxu0 0.0
    %273 = vmatpush1.msra.mxu0 0.0
    %274 = vmatprep.subr.mxu0 0.0
    %275 = vmatpush1.msra.mxu0 0.0
    %276 = vmatprep.mubr.f32.mxu0 0.0
    %277 = vmatmul.mubr.f32.gmra.mrb[0].mxu0 %v188
    %v278 = vpop.f32.mrb[0].mxu0
    %v279 = vadd.f32 %v210, %v278
    %v280 = vpop.f32.mrb[0].mxu0
    %281 = vdwg.mxu0
    %282 = vrot.lane.b32.xlu0 %v279, 64
    %v283 = vpop.permute.xlu0 %282
    %v284 = vmul.f32 %v283, 0.5
    %v285 = vmul.f32 %v284, 1.442695
    %v286 = vpow.pop %v285
    %v287 = vmul.f32 %v94, %v286
    %v288 = vadd.f32 %v287, %v279
    %v289 = vld [vmem:[#allocation7] sm:$0xff]
    %v290 = vld [vmem:[#allocation7 + $0x8] sm:$0xff]
    %v291 = vld [vmem:[#allocation7 + $0x10] sm:$0xff]
    %v292 = vld [vmem:[#allocation7 + $0x18] sm:$0xff]
    %v293 = vld [vmem:[#allocation7 + $0x20] sm:$0xff]
    %v294 = vld [vmem:[#allocation7 + $0x28] sm:$0xff]
    %v295 = vld [vmem:[#allocation7 + $0x30] sm:$0xff]
    %v296 = vld [vmem:[#allocation7 + $0x38] sm:$0xff]
    %v297 = vld [vmem:[#allocation7 + $0x40] sm:$0xff]
    %v298 = vld [vmem:[#allocation7 + $0x48] sm:$0xff]
    %v299 = vld [vmem:[#allocation7 + $0x50] sm:$0xff]
    %v300 = vld [vmem:[#allocation7 + $0x58] sm:$0xff]
    %v301 = vld [vmem:[#allocation7 + $0x60] sm:$0xff]
    %v302 = vld [vmem:[#allocation7 + $0x68] sm:$0xff]
    %v303 = vld [vmem:[#allocation7 + $0x70] sm:$0xff]
    %v304 = vld [vmem:[#allocation7 + $0x78] sm:$0xff]
    %v305 = vld [vmem:[%s7] sm:$0x1]
    %v307 = vlaneseq
    %v308 = vshrl.u32 %v307, 7
    %v309 = vsub.s32 0, %v308
    %v310 = vrot.slane %v305, %v309
    %312 = vmatprep.subr.mxu0 0.0
    %313 = vmatpush1.msra.mxu0 %v289
    %314 = vmatprep.subr.mxu0 0.0
    %315 = vmatpush1.msra.mxu0 %v290
    %316 = vmatprep.subr.mxu0 0.0
    %317 = vmatpush1.msra.mxu0 %v291
    %318 = vmatprep.subr.mxu0 0.0
    %319 = vmatpush1.msra.mxu0 %v292
    %320 = vmatprep.subr.mxu0 0.0
    %321 = vmatpush1.msra.mxu0 %v293
    %322 = vmatprep.subr.mxu0 0.0
    %323 = vmatpush1.msra.mxu0 %v294
    %324 = vmatprep.subr.mxu0 0.0
    %325 = vmatpush1.msra.mxu0 %v295
    %326 = vmatprep.subr.mxu0 0.0
    %327 = vmatpush1.msra.mxu0 %v296
    %328 = vmatprep.subr.mxu0 0.0
    %329 = vmatpush1.msra.mxu0 %v297
    %330 = vmatprep.subr.mxu0 0.0
    %331 = vmatpush1.msra.mxu0 %v298
    %332 = vmatprep.subr.mxu0 0.0
    %333 = vmatpush1.msra.mxu0 %v299
    %334 = vmatprep.subr.mxu0 0.0
    %335 = vmatpush1.msra.mxu0 %v300
    %336 = vmatprep.subr.mxu0 0.0
    %337 = vmatpush1.msra.mxu0 %v301
    %338 = vmatprep.subr.mxu0 0.0
    %339 = vmatpush1.msra.mxu0 %v302
    %340 = vmatprep.subr.mxu0 0.0
    %341 = vmatpush1.msra.mxu0 %v303
    %342 = vmatprep.subr.mxu0 0.0
    %343 = vmatpush1.msra.mxu0 %v304
    %344 = vmatprep.subr.mxu0 0.0
    %345 = vmatpush1.msra.mxu0 0.0
    %346 = vmatprep.subr.mxu0 0.0
    %347 = vmatpush1.msra.mxu0 0.0
    %348 = vmatprep.subr.mxu0 0.0
    %349 = vmatpush1.msra.mxu0 0.0
    %350 = vmatprep.subr.mxu0 0.0
    %351 = vmatpush1.msra.mxu0 0.0
    %352 = vmatprep.subr.mxu0 0.0
    %353 = vmatpush1.msra.mxu0 0.0
    %354 = vmatprep.subr.mxu0 0.0
    %355 = vmatpush1.msra.mxu0 0.0
    %356 = vmatprep.subr.mxu0 0.0
    %357 = vmatpush1.msra.mxu0 0.0
    %358 = vmatprep.subr.mxu0 0.0
    %359 = vmatpush1.msra.mxu0 0.0
    %360 = vmatprep.subr.mxu0 0.0
    %361 = vmatpush1.msra.mxu0 0.0
    %362 = vmatprep.subr.mxu0 0.0
    %363 = vmatpush1.msra.mxu0 0.0
    %364 = vmatprep.subr.mxu0 0.0
    %365 = vmatpush1.msra.mxu0 0.0
    %366 = vmatprep.subr.mxu0 0.0
    %367 = vmatpush1.msra.mxu0 0.0
    %368 = vmatprep.subr.mxu0 0.0
    %369 = vmatpush1.msra.mxu0 0.0
    %370 = vmatprep.subr.mxu0 0.0
    %371 = vmatpush1.msra.mxu0 0.0
    %372 = vmatprep.subr.mxu0 0.0
    %373 = vmatpush1.msra.mxu0 0.0
    %374 = vmatprep.subr.mxu0 0.0
    %375 = vmatpush1.msra.mxu0 0.0
    %376 = vmatprep.mubr.f32.mxu0 0.0
    %377 = vmatmul.mubr.f32.gmra.mrb[0].mxu0 %v288
    %v378 = vpop.f32.mrb[0].mxu0
    %v379 = vadd.f32 %v310, %v378
    %v380 = vpop.f32.mrb[0].mxu0
    %381 = vdwg.mxu0
    %v382 = vmax.f32 %v379, 0.0
    %v383 = vld [vmem:[#allocation8] sm:$0xff]
    %v384 = vld [vmem:[#allocation8 + $0x8] sm:$0xff]
    %v385 = vld [vmem:[#allocation8 + $0x10] sm:$0xff]
    %v386 = vld [vmem:[#allocation8 + $0x18] sm:$0xff]
    %v387 = vld [vmem:[#allocation8 + $0x20] sm:$0xff]
    %v388 = vld [vmem:[#allocation8 + $0x28] sm:$0xff]
    %v389 = vld [vmem:[#allocation8 + $0x30] sm:$0xff]
    %v390 = vld [vmem:[#allocation8 + $0x38] sm:$0xff]
    %v391 = vld [vmem:[#allocation8 + $0x40] sm:$0xff]
    %v392 = vld [vmem:[#allocation8 + $0x48] sm:$0xff]
    %v393 = vld [vmem:[#allocation8 + $0x50] sm:$0xff]
    %v394 = vld [vmem:[#allocation8 + $0x58] sm:$0xff]
    %v395 = vld [vmem:[#allocation8 + $0x60] sm:$0xff]
    %v396 = vld [vmem:[#allocation8 + $0x68] sm:$0xff]
    %v397 = vld [vmem:[#allocation8 + $0x70] sm:$0xff]
    %v398 = vld [vmem:[#allocation8 + $0x78] sm:$0xff]
    %v399 = vld [vmem:[%s9] sm:$0x1]
    %v401 = vlaneseq
    %v402 = vshrl.u32 %v401, 7
    %v403 = vsub.s32 0, %v402
    %v404 = vrot.slane %v399, %v403
    %406 = vmatprep.subr.mxu0 0.0
    %407 = vmatpush1.msra.mxu0 %v383
    %408 = vmatprep.subr.mxu0 0.0
    %409 = vmatpush1.msra.mxu0 %v384
    %410 = vmatprep.subr.mxu0 0.0
    %411 = vmatpush1.msra.mxu0 %v385
    %412 = vmatprep.subr.mxu0 0.0
    %413 = vmatpush1.msra.mxu0 %v386
    %414 = vmatprep.subr.mxu0 0.0
    %415 = vmatpush1.msra.mxu0 %v387
    %416 = vmatprep.subr.mxu0 0.0
    %417 = vmatpush1.msra.mxu0 %v388
    %418 = vmatprep.subr.mxu0 0.0
    %419 = vmatpush1.msra.mxu0 %v389
    %420 = vmatprep.subr.mxu0 0.0
    %421 = vmatpush1.msra.mxu0 %v390
    %422 = vmatprep.subr.mxu0 0.0
    %423 = vmatpush1.msra.mxu0 %v391
    %424 = vmatprep.subr.mxu0 0.0
    %425 = vmatpush1.msra.mxu0 %v392
    %426 = vmatprep.subr.mxu0 0.0
    %427 = vmatpush1.msra.mxu0 %v393
    %428 = vmatprep.subr.mxu0 0.0
    %429 = vmatpush1.msra.mxu0 %v394
    %430 = vmatprep.subr.mxu0 0.0
    %431 = vmatpush1.msra.mxu0 %v395
    %432 = vmatprep.subr.mxu0 0.0
    %433 = vmatpush1.msra.mxu0 %v396
    %434 = vmatprep.subr.mxu0 0.0
    %435 = vmatpush1.msra.mxu0 %v397
    %436 = vmatprep.subr.mxu0 0.0
    %437 = vmatpush1.msra.mxu0 %v398
    %438 = vmatprep.subr.mxu0 0.0
    %439 = vmatpush1.msra.mxu0 0.0
    %440 = vmatprep.subr.mxu0 0.0
    %441 = vmatpush1.msra.mxu0 0.0
    %442 = vmatprep.subr.mxu0 0.0
    %443 = vmatpush1.msra.mxu0 0.0
    %444 = vmatprep.subr.mxu0 0.0
    %445 = vmatpush1.msra.mxu0 0.0
    %446 = vmatprep.subr.mxu0 0.0
    %447 = vmatpush1.msra.mxu0 0.0
    %448 = vmatprep.subr.mxu0 0.0
    %449 = vmatpush1.msra.mxu0 0.0
    %450 = vmatprep.subr.mxu0 0.0
    %451 = vmatpush1.msra.mxu0 0.0
    %452 = vmatprep.subr.mxu0 0.0
    %453 = vmatpush1.msra.mxu0 0.0
    %454 = vmatprep.subr.mxu0 0.0
    %455 = vmatpush1.msra.mxu0 0.0
    %456 = vmatprep.subr.mxu0 0.0
    %457 = vmatpush1.msra.mxu0 0.0
    %458 = vmatprep.subr.mxu0 0.0
    %459 = vmatpush1.msra.mxu0 0.0
    %460 = vmatprep.subr.mxu0 0.0
    %461 = vmatpush1.msra.mxu0 0.0
    %462 = vmatprep.subr.mxu0 0.0
    %463 = vmatpush1.msra.mxu0 0.0
    %464 = vmatprep.subr.mxu0 0.0
    %465 = vmatpush1.msra.mxu0 0.0
    %466 = vmatprep.subr.mxu0 0.0
    %467 = vmatpush1.msra.mxu0 0.0
    %468 = vmatprep.subr.mxu0 0.0
    %469 = vmatpush1.msra.mxu0 0.0
    %470 = vmatprep.mubr.f32.mxu0 0.0
    %471 = vmatmul.mubr.f32.gmra.mrb[0].mxu0 %v382
    %v472 = vpop.f32.mrb[0].mxu0
    %v473 = vadd.f32 %v404, %v472
    %v474 = vpop.f32.mrb[0].mxu0
    %475 = vdwg.mxu0
    %v476 = vmul.f32 %v473, 0.5
    %v477 = vtanh.pop %v476
    %v478 = vmul.f32 %v477, 0.5
    %v479 = vadd.f32 %v478, 0.5
    %480 = vst [vmem:[#allocation10] sm:$0xff] %v479
    %481 = vst [vmem:[%s11] sm:$0xff] %v279
    // Predicated region
    $region58: #{vae_forward.1} parent=1 // pred_check
      _
    $region59: #{vae_forward.1} parent=1 // pred_check_branch
      %483 = sbr.rel (0) target = $region61
    $region60: #{vae_forward.1} parent=1 // pred_region
      %s485 = ssub.s32 128, 128
      %486 = vsyncadd [#allocation4], %s485
      %s488 = sshll.u32 [#allocation10], 4
      %s489 = int_to_ptr.vmem [resolvable:$true] %s488
      %491 = dma.vmem_to_hbm [thread:$0]  %s489, 128, %s10, [#allocation4]
    $region61: #{vae_forward.1} parent=1 // pred_fallthru
      _
    // Predicated region
    $region62: #{vae_forward.1} parent=1 // pred_check
      _
    $region63: #{vae_forward.1} parent=1 // pred_check_branch
      %493 = sbr.rel (0) target = $region65
    $region64: #{vae_forward.1} parent=1 // pred_region
      _
    $region65: #{vae_forward.1} parent=1 // pred_fallthru
      _
    // Predicated region
    $region66: #{vae_forward.1} parent=1 // pred_check
      _
    $region67: #{vae_forward.1} parent=1 // pred_check_branch
      %495 = sbr.rel (0) target = $region69
    $region68: #{vae_forward.1} parent=1 // pred_region
      %496 = dma.done [#allocation4], 128
    $region69: #{vae_forward.1} parent=1 // pred_fallthru
      _
    // Predicated region
    $region70: #{vae_forward.1} parent=1 // pred_check
      _
    $region71: #{vae_forward.1} parent=1 // pred_check_branch
      %498 = sbr.rel (0) target = $region73
    $region72: #{vae_forward.1} parent=1 // pred_region
      _
    $region73: #{vae_forward.1} parent=1 // pred_fallthru
      _
    %499 = vsyncpa [#allocation3], 1
    %500 = vsyncpa [#allocation6], 1
    %501 = vsyncpa [#allocation9], 1
    %502 = vsyncpa [#allocation4], 1

</llo_original>
